<compile_context>
chip_gen: v7x
topology: tpu7x:2x2x1
jax: 0.10.0
libtpu: 0.0.40
codegen_flags: <defaults>
</compile_context>

<pallas_src>
import functools

import jax
import jax.numpy as jnp
from jax.experimental import pallas as pl
from jax.experimental.pallas import tpu as pltpu


# --------------------------------------------------------------------------
# Fused Pallas kernel: the entire forward pass in one kernel invocation.
# --------------------------------------------------------------------------
def cnn1d_fused_kernel(*refs, num_cnn, num_linear, pads, pool, activ):
    """Argument layout (flat, in order):
      refs[0]                      : x block  (TN, L, Cin)   channels-last f32
      refs[1 : 1+2*num_cnn]        : (w_i, b_i) per conv, w_i (K*Cin, Cout)
                                                           b_i (1, Cout)
      refs[.. : ..+2*num_linear]   : (w_i, b_i) per linear, w_i (Fin, Fout)
                                                            b_i (1, Fout)
      last                         : o_ref (TN, Fout_last)
    """
    x_ref = refs[0]
    conv_refs = refs[1:1 + 2 * num_cnn]
    lin_refs = refs[1 + 2 * num_cnn:1 + 2 * num_cnn + 2 * num_linear]
    o_ref = refs[1 + 2 * num_cnn + 2 * num_linear]

    h = x_ref[...]                                   # (TN, L, Cin)
    n = h.shape[0]

    # ---- conv stages: Conv1d (im2col matmul) + MaxPool1d + bias + ReLU ----
    for i in range(num_cnn):
        w_ref = conv_refs[2 * i]                     # (K*Cin, Cout)
        b_ref = conv_refs[2 * i + 1]                 # (1, Cout)
        L, cin = h.shape[1], h.shape[2]
        kcin, cout = w_ref.shape
        K = kcin // cin
        p = pads[i]
        Lout = L + 2 * p - K + 1

        # Spatial zero-padding built in registers (no scratch, no store pass).
        if p > 0:
            zpad = jnp.zeros((n, p, cin), jnp.float32)
            xp = jnp.concatenate([zpad, h, zpad], axis=1)   # (n, L+2p, cin)
        else:
            xp = h

        # im2col LHS: contraction axis ordered [k-major, c-minor] to match
        # the (K, Cin, Cout)->(K*Cin, Cout) weight re-layout.
        lhs = jnp.concatenate([xp[:, k:k + Lout, :] for k in range(K)], axis=2)
        lhs = lhs.reshape(n * Lout, K * cin)
        acc = jnp.dot(lhs, w_ref[...],
                      preferred_element_type=jnp.float32)   # (n*Lout, Cout)

        # MaxPool1d(kernel=pool, stride=pool, padding=0); Lout % pool == 0.
        # Bias add + ReLU commute with max -> applied after pooling (half the
        # elementwise work, identical numerics).
        Lp = Lout // pool
        a4 = acc.reshape(n, Lp, pool, cout)
        pooled = a4[:, :, 0, :]
        for t in range(1, pool):                     # pool==2 -> one maximum
            pooled = jnp.maximum(pooled, a4[:, :, t, :])
        pooled = pooled + b_ref[...]                 # (1, Cout) broadcasts
        if activ:
            pooled = jnp.maximum(pooled, 0.0)
        h = pooled                                   # (n, Lp, Cout)

    # ---- flatten ----------------------------------------------------------
    # Channels-last flatten; lin0's weight rows were permuted at prep time so
    # this is bit-identical to PyTorch's (N, C, L) flatten followed by lin0.
    y = h.reshape(n, h.shape[1] * h.shape[2])

    # F.dropout(training=False) is identity -> nothing to do here.

    # ---- linear stages: Linear + ReLU --------------------------------------
    for i in range(num_linear):
        w_ref = lin_refs[2 * i]                      # (Fin, Fout)
        b_ref = lin_refs[2 * i + 1]                  # (1, Fout)
        y = jnp.dot(y, w_ref[...],
                    preferred_element_type=jnp.float32) + b_ref[...]
        if activ:
            y = jnp.maximum(y, 0.0)

    o_ref[...] = y


# --------------------------------------------------------------------------
# Wrapper: one pallas_call for the whole network, batch-tiled grid.
# --------------------------------------------------------------------------
_VMEM_LIMIT_BYTES = 32 * 1024 * 1024   # safe on v5e / v6e / v7x


def _pick_batch_tile(n):
    """TN == n (single block) or a multiple of 8 that divides n, so output
    block sublane constraints and exact grid tiling both hold."""
    if n <= 128 or n % 8 != 0:
        return n
    for tn in range(128, 0, -8):
        if n % tn == 0:
            return tn
    return n


def _full_spec(arr):
    """Whole-array block, same block for every grid step (weights/biases)."""
    zeros = (0,) * arr.ndim
    return pl.BlockSpec(arr.shape, lambda i, _z=zeros: _z)


def cnn1d_forward(input_seqs, prepped, cfg, training=False, channels_last=False):
    """input_seqs: (N, seq_len, L) PyTorch NCL layout (or NLC if channels_last)."""
    activ = cfg["activ"]
    pool_k, pool_s, pool_p = cfg["pool"]
    assert pool_k == pool_s and pool_p == 0, \
        "kernel assumes kernel==stride, pad==0 pooling"
    num_cnn, num_linear = cfg["num_cnn"], cfg["num_linear"]

    if channels_last:
        x = input_seqs.astype(jnp.float32)           # already (N, L, Cin)
    else:
        # Single tiny layout op; pass channels_last=True to remove it entirely.
        x = jnp.transpose(input_seqs, (0, 2, 1)).astype(jnp.float32)
    N, l0, c0 = x.shape

    tn = _pick_batch_tile(N)

    weight_args, weight_specs, pads = [], [], []
    l_cur, c_cur = l0, c0
    est_bytes = 4 * tn * l0 * c0                     # x block
    for i in range(num_cnn):
        w, b = prepped[f"cnn{i}"]                    # (K*Cin, Cout), (1, Cout)
        pad = int(cfg["conv_io"][i][3])
        kcin, cout = w.shape
        K = kcin // c_cur
        pads.append(pad)
        l_out = l_cur + 2 * pad - K + 1
        assert l_out % pool_k == 0, \
            "kernel assumes pooled length divides exactly (matches CFG)"
        # im2col lhs + matmul result live together; weights resident.
        est_bytes += 4 * (tn * l_out * kcin + tn * l_out * cout)
        est_bytes += 4 * (w.size + b.size)
        l_cur, c_cur = l_out // pool_k, cout
        weight_args += [w, b]
        weight_specs += [_full_spec(w), _full_spec(b)]
    for i in range(num_linear):
        w, b = prepped[f"lin{i}"]                    # (Fin, Fout), (1, Fout)
        est_bytes += 4 * (w.size + b.size + tn * w.shape[1])
        weight_args += [w, b]
        weight_specs += [_full_spec(w), _full_spec(b)]
    fout_last = prepped[f"lin{num_linear - 1}"][0].shape[1]

    # Guard the everything-resident design instead of silently blowing VMEM
    # (16 MiB default scoped on v5e, 32 MiB v6e/v7x, 64 MiB physical on v7x).
    assert 2 * est_bytes < _VMEM_LIMIT_BYTES, (
        "per-block VMEM footprint too large; reduce the batch tile", est_bytes)

    kernel = functools.partial(
        cnn1d_fused_kernel,
        num_cnn=num_cnn, num_linear=num_linear,
        pads=tuple(pads), pool=pool_k, activ=activ)

    if cfg["dropout"] and training:
        # TODO(synk): randomized dropout not needed — forward() runs with training=False.
        pass

    x_spec = pl.BlockSpec((tn, l0, c0), lambda i: (i, 0, 0))
    out_spec = pl.BlockSpec((tn, fout_last), lambda i: (i, 0))

    return pl.pallas_call(
        kernel,
        out_shape=jax.ShapeDtypeStruct((N, fout_last), jnp.float32),
        grid=(N // tn,),
        in_specs=[x_spec] + weight_specs,
        out_specs=out_spec,
        compiler_params=pltpu.CompilerParams(
            dimension_semantics=("parallel",),
            vmem_limit_bytes=_VMEM_LIMIT_BYTES),
    )(x, *weight_args)


# --------------------------------------------------------------------------
# Parameters: PyTorch-style init + one-time kernel-friendly re-layout.
# --------------------------------------------------------------------------
CFG = dict(
    seq_len=8,                      # Conv1d in-channels of the first layer
    num_cnn=2,
    conv_io=[[8, 16, 3, 1],         # (in, out, kernel, padding)
             [16, 32, 3, 1]],
    pool=(2, 2, 0),                 # (kernel, stride, padding)
    flat_num=128,
    num_linear=2,
    linear_io=[[128, 64], [64, 32]],
    activ=True,
    dropout=True,                   # F.dropout(training=False) -> identity
)


def init_params(key, cfg):
    """PyTorch-layout parameters (Conv1d: (Cout,Cin,K); Linear: (Fout,Fin))."""
    params = {}
    for i in range(cfg["num_cnn"]):
        cin = cfg["seq_len"] if i == 0 else cfg["conv_io"][i][0]
        cout, k = cfg["conv_io"][i][1], cfg["conv_io"][i][2]
        key, kw, kb = jax.random.split(key, 3)
        bound = 1.0 / (cin * k) ** 0.5
        params[f"cnn{i}"] = (
            jax.random.uniform(kw, (cout, cin, k), jnp.float32, -bound, bound),
            jax.random.uniform(kb, (cout,), jnp.float32, -bound, bound),
        )
        # (BatchNorm1d params exist in the PyTorch __init__ but are unused in forward.)
    for i in range(cfg["num_linear"]):
        fin = cfg["flat_num"] if i == 0 else cfg["linear_io"][i][0]
        fout = cfg["linear_io"][i][1]
        key, kw, kb = jax.random.split(key, 3)
        bound = 1.0 / fin ** 0.5
        params[f"lin{i}"] = (
            jax.random.uniform(kw, (fout, fin), jnp.float32, -bound, bound),
            jax.random.uniform(kb, (fout,), jnp.float32, -bound, bound),
        )
    return params


def prepare_params(params, cfg):
    """One-time re-layout so the forward pass needs zero weight transposes.

    conv_i : (Cout, Cin, K) -> (K, Cin, Cout) -> im2col (K*Cin, Cout),
             bias -> (1, Cout).  Row order is [k-major, c-minor], matching the
             kernel's im2col LHS construction.
    lin0   : columns permuted from PyTorch's (c*L + l) flatten order to the
             kernel's channels-last (l*C + c) order, then transposed to
             (Fin, Fout); other linears just transposed.  Biases -> (1, Fout).
    """
    prepped = {}
    for i in range(cfg["num_cnn"]):
        w, b = params[f"cnn{i}"]
        cout, cin, k = w.shape
        w_im2col = jnp.transpose(w, (2, 1, 0)).reshape(k * cin, cout)
        prepped[f"cnn{i}"] = (w_im2col, b.reshape(1, -1))

    c_last = cfg["conv_io"][cfg["num_cnn"] - 1][1]
    l_last = cfg["flat_num"] // c_last
    for i in range(cfg["num_linear"]):
        w, b = params[f"lin{i}"]
        if i == 0:
            fout = w.shape[0]
            # W[o, c*L + l]  ->  W'[o, l*C + c]
            w = (w.reshape(fout, c_last, l_last)
                   .transpose(0, 2, 1)
                   .reshape(fout, c_last * l_last))
        prepped[f"lin{i}"] = (w.T, b.reshape(1, -1))
    return prepped


# --------------------------------------------------------------------------
# Pure-JAX reference (PyTorch semantics) for a correctness check.
# --------------------------------------------------------------------------
def reference_forward(x_ncl, params, cfg):
    h = x_ncl
    pool_k = cfg["pool"][0]
    for i in range(cfg["num_cnn"]):
        w, b = params[f"cnn{i}"]
        pad = cfg["conv_io"][i][3]
        h = jax.lax.conv_general_dilated(
            h, w, window_strides=(1,), padding=[(pad, pad)],
            dimension_numbers=("NCH", "OIH", "NCH"))
        h = h + b[None, :, None]
        if cfg["activ"]:
            h = jnp.maximum(h, 0.0)
        h = jax.lax.reduce_window(
            h, -jnp.inf, jax.lax.max,
            (1, 1, pool_k), (1, 1, pool_k), "VALID")
    h = h.reshape(h.shape[0], -1)
    for i in range(cfg["num_linear"]):
        w, b = params[f"lin{i}"]
        h = h @ w.T + b
        if cfg["activ"]:
            h = jnp.maximum(h, 0.0)
    return h


# --------------------------------------------------------------------------
if __name__ == "__main__":
    key = jax.random.PRNGKey(0)
    key, kx = jax.random.split(key)

    N, C, L = 2, CFG["seq_len"], 16                  # (batch, seq_len, feature_len)
    x = jax.random.normal(kx, (N, C, L), jnp.float32)

    params = init_params(key, CFG)
    prepped = prepare_params(params, CFG)            # one-time weight re-layout

    fwd = jax.jit(functools.partial(cnn1d_forward, cfg=CFG))
    out = fwd(x, prepped)
    out = jax.block_until_ready(out)

    assert out.shape == (N, CFG["linear_io"][-1][1]), out.shape
    assert bool(jnp.all(jnp.isfinite(out)))

    ref = reference_forward(x, params, CFG)
    assert bool(jnp.allclose(out, ref, atol=1e-4, rtol=1e-4)), (
        float(jnp.max(jnp.abs(out - ref))))

    print("KERNEL_OK")
</pallas_src>

<mosaic_0001>
module attributes {stable_mosaic.version = 11 : i64} {
  func.func @cnn1d_fused_kernel(%arg0: i32, %arg1: memref<2x16x8xf32, #tpu.memory_space<vmem>>, %arg2: memref<24x16xf32, #tpu.memory_space<vmem>>, %arg3: memref<1x16xf32, #tpu.memory_space<vmem>>, %arg4: memref<48x32xf32, #tpu.memory_space<vmem>>, %arg5: memref<1x32xf32, #tpu.memory_space<vmem>>, %arg6: memref<128x64xf32, #tpu.memory_space<vmem>>, %arg7: memref<1x64xf32, #tpu.memory_space<vmem>>, %arg8: memref<64x32xf32, #tpu.memory_space<vmem>>, %arg9: memref<1x32xf32, #tpu.memory_space<vmem>>, %arg10: memref<2x32xf32, #tpu.memory_space<vmem>>) attributes {dimension_semantics = [#tpu.dimension_semantics<parallel>], iteration_bounds = array<i64: 1>, scalar_prefetch = 0 : i64, scratch_operands = 0 : i64, tpu.core_type = #tpu.core_type<tc>, window_params = [{transform_indices = @transform_0, window_bounds = array<i64: 2, 16, 8>}, {pipeline_mode = #tpu.pipeline_mode<synchronous>, transform_indices = @transform_1, window_bounds = array<i64: 24, 16>}, {pipeline_mode = #tpu.pipeline_mode<synchronous>, transform_indices = @transform_2, window_bounds = array<i64: 1, 16>}, {pipeline_mode = #tpu.pipeline_mode<synchronous>, transform_indices = @transform_3, window_bounds = array<i64: 48, 32>}, {pipeline_mode = #tpu.pipeline_mode<synchronous>, transform_indices = @transform_4, window_bounds = array<i64: 1, 32>}, {pipeline_mode = #tpu.pipeline_mode<synchronous>, transform_indices = @transform_5, window_bounds = array<i64: 128, 64>}, {pipeline_mode = #tpu.pipeline_mode<synchronous>, transform_indices = @transform_6, window_bounds = array<i64: 1, 64>}, {pipeline_mode = #tpu.pipeline_mode<synchronous>, transform_indices = @transform_7, window_bounds = array<i64: 64, 32>}, {pipeline_mode = #tpu.pipeline_mode<synchronous>, transform_indices = @transform_8, window_bounds = array<i64: 1, 32>}, {transform_indices = @transform_9, window_bounds = array<i64: 2, 32>}]} {
    %c0 = arith.constant 0 : index
    %c0_0 = arith.constant 0 : index
    %c0_1 = arith.constant 0 : index
    %0 = vector.load %arg1[%c0, %c0_0, %c0_1] : memref<2x16x8xf32, #tpu.memory_space<vmem>>, vector<2x16x8xf32>
    %cst = arith.constant 0.000000e+00 : f32
    %1 = vector.broadcast %cst : f32 to vector<2x1x8xf32>
    %2 = tpu.concatenate %1, %0, %1 in 1 : vector<2x1x8xf32>, vector<2x16x8xf32>, vector<2x1x8xf32> -> vector<2x18x8xf32>
    %3 = vector.extract_strided_slice %2 {offsets = [0, 0, 0], sizes = [2, 16, 8], strides = [1, 1, 1]} : vector<2x18x8xf32> to vector<2x16x8xf32>
    %4 = vector.extract_strided_slice %2 {offsets = [0, 1, 0], sizes = [2, 16, 8], strides = [1, 1, 1]} : vector<2x18x8xf32> to vector<2x16x8xf32>
    %5 = vector.extract_strided_slice %2 {offsets = [0, 2, 0], sizes = [2, 16, 8], strides = [1, 1, 1]} : vector<2x18x8xf32> to vector<2x16x8xf32>
    %6 = tpu.concatenate %3, %4, %5 in 2 : vector<2x16x8xf32>, vector<2x16x8xf32>, vector<2x16x8xf32> -> vector<2x16x24xf32>
    %7 = vector.shape_cast %6 : vector<2x16x24xf32> to vector<32x24xf32>
    %c0_2 = arith.constant 0 : index
    %c0_3 = arith.constant 0 : index
    %8 = vector.load %arg2[%c0_2, %c0_3] : memref<24x16xf32, #tpu.memory_space<vmem>>, vector<24x16xf32>
    %cst_4 = arith.constant dense<0.000000e+00> : vector<32x16xf32>
    %9 = tpu.matmul %7, %8, %cst_4 {dimension_numbers = #tpu.dot_dimension_numbers<[1], [0], [0], [1], [0, 0, 1, 1], [], []>} : vector<32x24xf32>, vector<24x16xf32>, vector<32x16xf32> -> vector<32x16xf32>
    %10 = vector.shape_cast %9 : vector<32x16xf32> to vector<2x8x2x16xf32>
    %11 = vector.extract_strided_slice %10 {offsets = [0, 0, 0, 0], sizes = [2, 8, 1, 16], strides = [1, 1, 1, 1]} : vector<2x8x2x16xf32> to vector<2x8x1x16xf32>
    %12 = vector.shape_cast %11 : vector<2x8x1x16xf32> to vector<2x8x16xf32>
    %13 = vector.extract_strided_slice %10 {offsets = [0, 0, 1, 0], sizes = [2, 8, 1, 16], strides = [1, 1, 1, 1]} : vector<2x8x2x16xf32> to vector<2x8x1x16xf32>
    %14 = vector.shape_cast %13 : vector<2x8x1x16xf32> to vector<2x8x16xf32>
    %15 = arith.maximumf %12, %14 : vector<2x8x16xf32>
    %c0_5 = arith.constant 0 : index
    %c0_6 = arith.constant 0 : index
    %16 = vector.load %arg3[%c0_5, %c0_6] : memref<1x16xf32, #tpu.memory_space<vmem>>, vector<1x16xf32>
    %17 = vector.shape_cast %16 : vector<1x16xf32> to vector<1x1x16xf32>
    %18 = vector.broadcast %17 : vector<1x1x16xf32> to vector<2x8x16xf32>
    %19 = arith.addf %15, %18 : vector<2x8x16xf32>
    %cst_7 = arith.constant 0.000000e+00 : f32
    %20 = vector.broadcast %cst_7 : f32 to vector<2x8x16xf32>
    %21 = arith.maximumf %19, %20 : vector<2x8x16xf32>
    %cst_8 = arith.constant 0.000000e+00 : f32
    %22 = vector.broadcast %cst_8 : f32 to vector<2x1x16xf32>
    %23 = tpu.concatenate %22, %21, %22 in 1 : vector<2x1x16xf32>, vector<2x8x16xf32>, vector<2x1x16xf32> -> vector<2x10x16xf32>
    %24 = vector.extract_strided_slice %23 {offsets = [0, 0, 0], sizes = [2, 8, 16], strides = [1, 1, 1]} : vector<2x10x16xf32> to vector<2x8x16xf32>
    %25 = vector.extract_strided_slice %23 {offsets = [0, 1, 0], sizes = [2, 8, 16], strides = [1, 1, 1]} : vector<2x10x16xf32> to vector<2x8x16xf32>
    %26 = vector.extract_strided_slice %23 {offsets = [0, 2, 0], sizes = [2, 8, 16], strides = [1, 1, 1]} : vector<2x10x16xf32> to vector<2x8x16xf32>
    %27 = tpu.concatenate %24, %25, %26 in 2 : vector<2x8x16xf32>, vector<2x8x16xf32>, vector<2x8x16xf32> -> vector<2x8x48xf32>
    %28 = vector.shape_cast %27 : vector<2x8x48xf32> to vector<16x48xf32>
    %c0_9 = arith.constant 0 : index
    %c0_10 = arith.constant 0 : index
    %29 = vector.load %arg4[%c0_9, %c0_10] : memref<48x32xf32, #tpu.memory_space<vmem>>, vector<48x32xf32>
    %cst_11 = arith.constant dense<0.000000e+00> : vector<16x32xf32>
    %30 = tpu.matmul %28, %29, %cst_11 {dimension_numbers = #tpu.dot_dimension_numbers<[1], [0], [0], [1], [0, 0, 1, 1], [], []>} : vector<16x48xf32>, vector<48x32xf32>, vector<16x32xf32> -> vector<16x32xf32>
    %31 = vector.shape_cast %30 : vector<16x32xf32> to vector<2x4x2x32xf32>
    %32 = vector.extract_strided_slice %31 {offsets = [0, 0, 0, 0], sizes = [2, 4, 1, 32], strides = [1, 1, 1, 1]} : vector<2x4x2x32xf32> to vector<2x4x1x32xf32>
    %33 = vector.shape_cast %32 : vector<2x4x1x32xf32> to vector<2x4x32xf32>
    %34 = vector.extract_strided_slice %31 {offsets = [0, 0, 1, 0], sizes = [2, 4, 1, 32], strides = [1, 1, 1, 1]} : vector<2x4x2x32xf32> to vector<2x4x1x32xf32>
    %35 = vector.shape_cast %34 : vector<2x4x1x32xf32> to vector<2x4x32xf32>
    %36 = arith.maximumf %33, %35 : vector<2x4x32xf32>
    %c0_12 = arith.constant 0 : index
    %c0_13 = arith.constant 0 : index
    %37 = vector.load %arg5[%c0_12, %c0_13] : memref<1x32xf32, #tpu.memory_space<vmem>>, vector<1x32xf32>
    %38 = vector.shape_cast %37 : vector<1x32xf32> to vector<1x1x32xf32>
    %39 = vector.broadcast %38 : vector<1x1x32xf32> to vector<2x4x32xf32>
    %40 = arith.addf %36, %39 : vector<2x4x32xf32>
    %cst_14 = arith.constant 0.000000e+00 : f32
    %41 = vector.broadcast %cst_14 : f32 to vector<2x4x32xf32>
    %42 = arith.maximumf %40, %41 : vector<2x4x32xf32>
    %43 = vector.shape_cast %42 : vector<2x4x32xf32> to vector<2x128xf32>
    %c0_15 = arith.constant 0 : index
    %c0_16 = arith.constant 0 : index
    %44 = vector.load %arg6[%c0_15, %c0_16] : memref<128x64xf32, #tpu.memory_space<vmem>>, vector<128x64xf32>
    %cst_17 = arith.constant dense<0.000000e+00> : vector<2x64xf32>
    %45 = tpu.matmul %43, %44, %cst_17 {dimension_numbers = #tpu.dot_dimension_numbers<[1], [0], [0], [1], [0, 0, 1, 1], [], []>} : vector<2x128xf32>, vector<128x64xf32>, vector<2x64xf32> -> vector<2x64xf32>
    %c0_18 = arith.constant 0 : index
    %c0_19 = arith.constant 0 : index
    %46 = vector.load %arg7[%c0_18, %c0_19] : memref<1x64xf32, #tpu.memory_space<vmem>>, vector<1x64xf32>
    %47 = vector.broadcast %46 : vector<1x64xf32> to vector<2x64xf32>
    %48 = arith.addf %45, %47 : vector<2x64xf32>
    %cst_20 = arith.constant 0.000000e+00 : f32
    %49 = vector.broadcast %cst_20 : f32 to vector<2x64xf32>
    %50 = arith.maximumf %48, %49 : vector<2x64xf32>
    %c0_21 = arith.constant 0 : index
    %c0_22 = arith.constant 0 : index
    %51 = vector.load %arg8[%c0_21, %c0_22] : memref<64x32xf32, #tpu.memory_space<vmem>>, vector<64x32xf32>
    %cst_23 = arith.constant dense<0.000000e+00> : vector<2x32xf32>
    %52 = tpu.matmul %50, %51, %cst_23 {dimension_numbers = #tpu.dot_dimension_numbers<[1], [0], [0], [1], [0, 0, 1, 1], [], []>} : vector<2x64xf32>, vector<64x32xf32>, vector<2x32xf32> -> vector<2x32xf32>
    %c0_24 = arith.constant 0 : index
    %c0_25 = arith.constant 0 : index
    %53 = vector.load %arg9[%c0_24, %c0_25] : memref<1x32xf32, #tpu.memory_space<vmem>>, vector<1x32xf32>
    %54 = vector.broadcast %53 : vector<1x32xf32> to vector<2x32xf32>
    %55 = arith.addf %52, %54 : vector<2x32xf32>
    %cst_26 = arith.constant 0.000000e+00 : f32
    %56 = vector.broadcast %cst_26 : f32 to vector<2x32xf32>
    %57 = arith.maximumf %55, %56 : vector<2x32xf32>
    %c0_27 = arith.constant 0 : index
    %c0_28 = arith.constant 0 : index
    %58 = vector.load %arg10[%c0_27, %c0_28] : memref<2x32xf32, #tpu.memory_space<vmem>>, vector<2x32xf32>
    tpu.vector_store %arg10[%c0_27, %c0_28], %57 {strides = array<i32>} : memref<2x32xf32, #tpu.memory_space<vmem>>, vector<2x32xf32>,
    return
  }
  func.func @transform_0(%arg0: i32) -> (i32, i32, i32) {
    %c0_i32 = arith.constant 0 : i32
    %c0_i32_0 = arith.constant 0 : i32
    %c0_i32_1 = arith.constant 0 : i32
    return %arg0, %c0_i32, %c0_i32_0 : i32, i32, i32
  }
  func.func @transform_1(%arg0: i32) -> (i32, i32) {
    %c0_i32 = arith.constant 0 : i32
    %c0_i32_0 = arith.constant 0 : i32
    %c0_i32_1 = arith.constant 0 : i32
    return %c0_i32, %c0_i32_0 : i32, i32
  }
  func.func @transform_2(%arg0: i32) -> (i32, i32) {
    %c0_i32 = arith.constant 0 : i32
    %c0_i32_0 = arith.constant 0 : i32
    %c0_i32_1 = arith.constant 0 : i32
    return %c0_i32, %c0_i32_0 : i32, i32
  }
  func.func @transform_3(%arg0: i32) -> (i32, i32) {
    %c0_i32 = arith.constant 0 : i32
    %c0_i32_0 = arith.constant 0 : i32
    %c0_i32_1 = arith.constant 0 : i32
    return %c0_i32, %c0_i32_0 : i32, i32
  }
  func.func @transform_4(%arg0: i32) -> (i32, i32) {
    %c0_i32 = arith.constant 0 : i32
    %c0_i32_0 = arith.constant 0 : i32
    %c0_i32_1 = arith.constant 0 : i32
    return %c0_i32, %c0_i32_0 : i32, i32
  }
  func.func @transform_5(%arg0: i32) -> (i32, i32) {
    %c0_i32 = arith.constant 0 : i32
    %c0_i32_0 = arith.constant 0 : i32
    %c0_i32_1 = arith.constant 0 : i32
    return %c0_i32, %c0_i32_0 : i32, i32
  }
  func.func @transform_6(%arg0: i32) -> (i32, i32) {
    %c0_i32 = arith.constant 0 : i32
    %c0_i32_0 = arith.constant 0 : i32
    %c0_i32_1 = arith.constant 0 : i32
    return %c0_i32, %c0_i32_0 : i32, i32
  }
  func.func @transform_7(%arg0: i32) -> (i32, i32) {
    %c0_i32 = arith.constant 0 : i32
    %c0_i32_0 = arith.constant 0 : i32
    %c0_i32_1 = arith.constant 0 : i32
    return %c0_i32, %c0_i32_0 : i32, i32
  }
  func.func @transform_8(%arg0: i32) -> (i32, i32) {
    %c0_i32 = arith.constant 0 : i32
    %c0_i32_0 = arith.constant 0 : i32
    %c0_i32_1 = arith.constant 0 : i32
    return %c0_i32, %c0_i32_0 : i32, i32
  }
  func.func @transform_9(%arg0: i32) -> (i32, i32) {
    %c0_i32 = arith.constant 0 : i32
    %c0_i32_0 = arith.constant 0 : i32
    return %arg0, %c0_i32 : i32, i32
  }
}

</mosaic_0001>

<llo_original>
// kernel: cnn1d_forward.1
$region0: #{cnn1d_forward.1}
  #allocation0 [shape = 'u32[]', space=smem, size = 0x4, offset = 0x4, fixed_abs, tag = 'smem constant byte address 0x4 - core index']
  #allocation1 [shape = 'u32[144,128]{1,0:T(1,128)}', space=vmem, size = 0x12000, scoped, tag = 'internal scratch']
  %s0 = inlined_call_operand.vmem [shape: f32[2,16,8], index: 0, kind: input, shape index: {}]
  %s1 = inlined_call_operand.vmem [shape: f32[24,16], index: 1, kind: input, shape index: {}]
  %s2 = inlined_call_operand.vmem [shape: f32[1,16], index: 2, kind: input, shape index: {}]
  %s3 = inlined_call_operand.vmem [shape: f32[48,32], index: 3, kind: input, shape index: {}]
  %s4 = inlined_call_operand.vmem [shape: f32[1,32], index: 4, kind: input, shape index: {}]
  %s5 = inlined_call_operand.vmem [shape: f32[128,64], index: 5, kind: input, shape index: {}]
  %s6 = inlined_call_operand.vmem [shape: f32[1,64], index: 6, kind: input, shape index: {}]
  %s7 = inlined_call_operand.vmem [shape: f32[64,32], index: 7, kind: input, shape index: {}]
  %s8 = inlined_call_operand.vmem [shape: f32[1,32], index: 8, kind: input, shape index: {}]
  %s9 = inlined_call_operand.hbm [shape: f32[2,32], index: 9, kind: output, shape index: {}]
  %s10 = sld [smem:[#allocation0]]
  $region46: #{cnn1d_forward.1} parent=0
    _
  %s12 = ssub.s32 1, %s10
  %s13 = scalar_select 0, %s12, %s10
  $region1: #{cnn1d_forward.1} parent=0
    #allocation2 [shape = 'u8[1024]{0}', space=vmem, size = 0x400, scoped, tag = 'output window, operand 0, single buffered']
    #allocation3 [shape = 's32[1]{0}', space=sflag, size = 0x4, scoped, tag = 'scoped memory for cnn1d_forward.1']
    %14 = vsyncpa [#allocation3], 0
    // Predicated region
    $region2: #{cnn1d_forward.1} parent=1 // pred_check
      _
    $region3: #{cnn1d_forward.1} parent=1 // pred_check_branch
      %16 = sbr.rel (0) target = $region5
    $region4: #{cnn1d_forward.1} parent=1 // pred_region
      _
    $region5: #{cnn1d_forward.1} parent=1 // pred_fallthru
      _
    // Predicated region
    $region6: #{cnn1d_forward.1} parent=1 // pred_check
      _
    $region7: #{cnn1d_forward.1} parent=1 // pred_check_branch
      %18 = sbr.rel (0) target = $region9
    $region8: #{cnn1d_forward.1} parent=1 // pred_region
      _
    $region9: #{cnn1d_forward.1} parent=1 // pred_fallthru
      _
    // Predicated region
    $region10: #{cnn1d_forward.1} parent=1 // pred_check
      _
    $region11: #{cnn1d_forward.1} parent=1 // pred_check_branch
      %20 = sbr.rel (0) target = $region13
    $region12: #{cnn1d_forward.1} parent=1 // pred_region
      _
    $region13: #{cnn1d_forward.1} parent=1 // pred_fallthru
      _
    // Predicated region
    $region14: #{cnn1d_forward.1} parent=1 // pred_check
      _
    $region15: #{cnn1d_forward.1} parent=1 // pred_check_branch
      %22 = sbr.rel (0) target = $region17
    $region16: #{cnn1d_forward.1} parent=1 // pred_region
      _
    $region17: #{cnn1d_forward.1} parent=1 // pred_fallthru
      _
    // Predicated region
    $region18: #{cnn1d_forward.1} parent=1 // pred_check
      _
    $region19: #{cnn1d_forward.1} parent=1 // pred_check_branch
      %24 = sbr.rel (0) target = $region21
    $region20: #{cnn1d_forward.1} parent=1 // pred_region
      _
    $region21: #{cnn1d_forward.1} parent=1 // pred_fallthru
      _
    // Predicated region
    $region22: #{cnn1d_forward.1} parent=1 // pred_check
      _
    $region23: #{cnn1d_forward.1} parent=1 // pred_check_branch
      %26 = sbr.rel (0) target = $region25
    $region24: #{cnn1d_forward.1} parent=1 // pred_region
      _
    $region25: #{cnn1d_forward.1} parent=1 // pred_fallthru
      _
    // Predicated region
    $region26: #{cnn1d_forward.1} parent=1 // pred_check
      _
    $region27: #{cnn1d_forward.1} parent=1 // pred_check_branch
      %28 = sbr.rel (0) target = $region29
    $region28: #{cnn1d_forward.1} parent=1 // pred_region
      _
    $region29: #{cnn1d_forward.1} parent=1 // pred_fallthru
      _
    // Predicated region
    $region30: #{cnn1d_forward.1} parent=1 // pred_check
      _
    $region31: #{cnn1d_forward.1} parent=1 // pred_check_branch
      %30 = sbr.rel (0) target = $region33
    $region32: #{cnn1d_forward.1} parent=1 // pred_region
      _
    $region33: #{cnn1d_forward.1} parent=1 // pred_fallthru
      _
    // Predicated region
    $region34: #{cnn1d_forward.1} parent=1 // pred_check
      _
    $region35: #{cnn1d_forward.1} parent=1 // pred_check_branch
      %32 = sbr.rel (0) target = $region37
    $region36: #{cnn1d_forward.1} parent=1 // pred_region
      _
    $region37: #{cnn1d_forward.1} parent=1 // pred_fallthru
      _
    %v33 = vld [vmem:[%s0] sm:$0xff]
    %v34 = vld [vmem:[%s0 + $0x8] sm:$0xff]
    %v35 = vld [vmem:[%s0 + $0x10] sm:$0xff]
    %v36 = vld [vmem:[%s0 + $0x18] sm:$0xff]
    %vm41 = vcmask 1040384
    %v42 = vrot.slane %v33, 7
    %v43 = vrot.slane %v34, 7
    %v44 = vsel %vm41, %v42, %v43
    %v45 = vrot.slane %v35, 7
    %v46 = vrot.slane %v36, 7
    %v47 = vsel %vm41, %v45, %v46
    %v54 = vsel %vm41, 0.0, %v42
    %v55 = vsel %vm41, 0.0, %v45
    %v56 = vsel %vm41, %v43, 0.0
    %v57 = vsel %vm41, %v46, 0.0
    %vm62 = vcmask 1046528
    %v63 = vrot.slane %v54, 1
    %v64 = vrot.slane %v44, 1
    %v65 = vsel %vm62, %v63, %v64
    %v66 = vrot.slane %v56, 1
    %v67 = vsel %vm62, %v64, %v66
    %v68 = vrot.slane %v55, 1
    %v69 = vrot.slane %v47, 1
    %v70 = vsel %vm62, %v68, %v69
    %v71 = vrot.slane %v57, 1
    %v72 = vsel %vm62, %v69, %v71
    %73 = vrot.lane.b32.xlu0 %v65, 8
    %v74 = vpop.permute.xlu0 %73
    %75 = vrot.lane.b32.xlu0 %v67, 8
    %v76 = vpop.permute.xlu0 %75
    %77 = vrot.lane.b32.xlu0 %v70, 8
    %v78 = vpop.permute.xlu0 %77
    %79 = vrot.lane.b32.xlu0 %v72, 8
    %v80 = vpop.permute.xlu0 %79
    %vm85 = vcmask 1045504
    %v86 = vrot.slane %v54, 2
    %v87 = vrot.slane %v44, 2
    %v88 = vsel %vm85, %v86, %v87
    %v89 = vrot.slane %v56, 2
    %v90 = vsel %vm85, %v87, %v89
    %v91 = vrot.slane %v55, 2
    %v92 = vrot.slane %v47, 2
    %v93 = vsel %vm85, %v91, %v92
    %v94 = vrot.slane %v57, 2
    %v95 = vsel %vm85, %v92, %v94
    %96 = vrot.lane.b32.xlu0 %v88, 16
    %v97 = vpop.permute.xlu0 %96
    %98 = vrot.lane.b32.xlu0 %v90, 16
    %v99 = vpop.permute.xlu0 %98
    %100 = vrot.lane.b32.xlu0 %v93, 16
    %v101 = vpop.permute.xlu0 %100
    %102 = vrot.lane.b32.xlu0 %v95, 16
    %v103 = vpop.permute.xlu0 %102
    %vm108 = vcmask 64512
    %v109 = vsel %vm108, %v54, %v74
    %v110 = vsel %vm108, %v44, %v76
    %v111 = vsel %vm108, %v55, %v78
    %v112 = vsel %vm108, %v47, %v80
    %vm113 = vcmask 130048
    %v114 = vsel %vm113, %v109, %v97
    %v115 = vsel %vm113, %v110, %v99
    %v116 = vsel %vm113, %v111, %v101
    %v117 = vsel %vm113, %v112, %v103
    %v118 = vld [vmem:[%s1] sm:$0xff]
    %v119 = vld [vmem:[%s1 + $0x8] sm:$0xff]
    %v120 = vld [vmem:[%s1 + $0x10] sm:$0xff]
    %vm121 = vcmask 195584
    %v123 = vsel %vm121, %v114, 0
    %v126 = vsel %vm121, %v115, 0
    %v129 = vsel %vm121, %v116, 0
    %v132 = vsel %vm121, %v117, 0
    %134 = vmatprep.subr.mxu0 0.0
    %135 = vmatpush1.msra.mxu0 %v118
    %136 = vmatprep.subr.mxu0 0.0
    %137 = vmatpush1.msra.mxu0 %v119
    %138 = vmatprep.subr.mxu0 0.0
    %139 = vmatpush1.msra.mxu0 %v120
    %140 = vmatprep.subr.mxu0 0.0
    %141 = vmatpush1.msra.mxu0 0.0
    %142 = vmatprep.subr.mxu0 0.0
    %143 = vmatpush1.msra.mxu0 0.0
    %144 = vmatprep.subr.mxu0 0.0
    %145 = vmatpush1.msra.mxu0 0.0
    %146 = vmatprep.subr.mxu0 0.0
    %147 = vmatpush1.msra.mxu0 0.0
    %148 = vmatprep.subr.mxu0 0.0
    %149 = vmatpush1.msra.mxu0 0.0
    %150 = vmatprep.subr.mxu0 0.0
    %151 = vmatpush1.msra.mxu0 0.0
    %152 = vmatprep.subr.mxu0 0.0
    %153 = vmatpush1.msra.mxu0 0.0
    %154 = vmatprep.subr.mxu0 0.0
    %155 = vmatpush1.msra.mxu0 0.0
    %156 = vmatprep.subr.mxu0 0.0
    %157 = vmatpush1.msra.mxu0 0.0
    %158 = vmatprep.subr.mxu0 0.0
    %159 = vmatpush1.msra.mxu0 0.0
    %160 = vmatprep.subr.mxu0 0.0
    %161 = vmatpush1.msra.mxu0 0.0
    %162 = vmatprep.subr.mxu0 0.0
    %163 = vmatpush1.msra.mxu0 0.0
    %164 = vmatprep.subr.mxu0 0.0
    %165 = vmatpush1.msra.mxu0 0.0
    %166 = vmatprep.subr.mxu0 0.0
    %167 = vmatpush1.msra.mxu0 0.0
    %168 = vmatprep.subr.mxu0 0.0
    %169 = vmatpush1.msra.mxu0 0.0
    %170 = vmatprep.subr.mxu0 0.0
    %171 = vmatpush1.msra.mxu0 0.0
    %172 = vmatprep.subr.mxu0 0.0
    %173 = vmatpush1.msra.mxu0 0.0
    %174 = vmatprep.subr.mxu0 0.0
    %175 = vmatpush1.msra.mxu0 0.0
    %176 = vmatprep.subr.mxu0 0.0
    %177 = vmatpush1.msra.mxu0 0.0
    %178 = vmatprep.subr.mxu0 0.0
    %179 = vmatpush1.msra.mxu0 0.0
    %180 = vmatprep.subr.mxu0 0.0
    %181 = vmatpush1.msra.mxu0 0.0
    %182 = vmatprep.subr.mxu0 0.0
    %183 = vmatpush1.msra.mxu0 0.0
    %184 = vmatprep.subr.mxu0 0.0
    %185 = vmatpush1.msra.mxu0 0.0
    %186 = vmatprep.subr.mxu0 0.0
    %187 = vmatpush1.msra.mxu0 0.0
    %188 = vmatprep.subr.mxu0 0.0
    %189 = vmatpush1.msra.mxu0 0.0
    %190 = vmatprep.subr.mxu0 0.0
    %191 = vmatpush1.msra.mxu0 0.0
    %192 = vmatprep.subr.mxu0 0.0
    %193 = vmatpush1.msra.mxu0 0.0
    %194 = vmatprep.subr.mxu0 0.0
    %195 = vmatpush1.msra.mxu0 0.0
    %196 = vmatprep.subr.mxu0 0.0
    %197 = vmatpush1.msra.mxu0 0.0
    %198 = vmatprep.mubr.f32.mxu0 0.0
    %199 = vmatmul.mubr.f32.gmra.mrb[0].mxu0 %v123
    %v200 = vpop.f32.mrb[0].mxu0
    %v201 = vadd.f32 0.0, %v200
    %v202 = vpop.f32.mrb[0].mxu0
    %203 = vmatprep.mubr.f32.mxu0 0.0
    %204 = vmatmul.mubr.f32.gmra.mrb[0].mxu0 %v126
    %v205 = vpop.f32.mrb[0].mxu0
    %v206 = vadd.f32 0.0, %v205
    %v207 = vpop.f32.mrb[0].mxu0
    %208 = vmatprep.mubr.f32.mxu0 0.0
    %209 = vmatmul.mubr.f32.gmra.mrb[0].mxu0 %v129
    %v210 = vpop.f32.mrb[0].mxu0
    %v211 = vadd.f32 0.0, %v210
    %v212 = vpop.f32.mrb[0].mxu0
    %213 = vmatprep.mubr.f32.mxu0 0.0
    %214 = vmatmul.mubr.f32.gmra.mrb[0].mxu0 %v132
    %v215 = vpop.f32.mrb[0].mxu0
    %v216 = vadd.f32 0.0, %v215
    %v217 = vpop.f32.mrb[0].mxu0
    %218 = vdwg.mxu0
    %v223 = vcombine.high %v201, %v201
    %v225 = vunpack.c.l.s4 1983009808
    %v226 = vunpack.c.0.s8 %v225
    %v227 = vlaneseq
    %v228 = vshrl.u32 %v227, 7
    %v229 = vsub.s32 %v226, %v228
    %v230 = vrot.slane %v201, %v229
    %v232 = vunpack.c.l.s4 1983009808
    %v233 = vunpack.c.0.s8 %v232
    %v234 = vlaneseq
    %v235 = vshrl.u32 %v234, 7
    %v236 = vsub.s32 %v233, %v235
    %v237 = vrot.slane %v223, %v236
    %v238 = vcombine.high %v230, %v230
    %v239 = vcombine.high %v237, %v237
    %v240 = vcombine.high %v206, %v206
    %v242 = vunpack.c.l.s4 1983009808
    %v243 = vunpack.c.0.s8 %v242
    %v244 = vlaneseq
    %v245 = vshrl.u32 %v244, 7
    %v246 = vsub.s32 %v243, %v245
    %v247 = vrot.slane %v206, %v246
    %v249 = vunpack.c.l.s4 1983009808
    %v250 = vunpack.c.0.s8 %v249
    %v251 = vlaneseq
    %v252 = vshrl.u32 %v251, 7
    %v253 = vsub.s32 %v250, %v252
    %v254 = vrot.slane %v240, %v253
    %v255 = vcombine.high %v247, %v247
    %v256 = vcombine.high %v254, %v254
    %v257 = vcombine.high %v211, %v211
    %v259 = vunpack.c.l.s4 1983009808
    %v260 = vunpack.c.0.s8 %v259
    %v261 = vlaneseq
    %v262 = vshrl.u32 %v261, 7
    %v263 = vsub.s32 %v260, %v262
    %v264 = vrot.slane %v211, %v263
    %v266 = vunpack.c.l.s4 1983009808
    %v267 = vunpack.c.0.s8 %v266
    %v268 = vlaneseq
    %v269 = vshrl.u32 %v268, 7
    %v270 = vsub.s32 %v267, %v269
    %v271 = vrot.slane %v257, %v270
    %v272 = vcombine.high %v264, %v264
    %v273 = vcombine.high %v271, %v271
    %v274 = vcombine.high %v216, %v216
    %v276 = vunpack.c.l.s4 1983009808
    %v277 = vunpack.c.0.s8 %v276
    %v278 = vlaneseq
    %v279 = vshrl.u32 %v278, 7
    %v280 = vsub.s32 %v277, %v279
    %v281 = vrot.slane %v216, %v280
    %v283 = vunpack.c.l.s4 1983009808
    %v284 = vunpack.c.0.s8 %v283
    %v285 = vlaneseq
    %v286 = vshrl.u32 %v285, 7
    %v287 = vsub.s32 %v284, %v286
    %v288 = vrot.slane %v274, %v287
    %v289 = vcombine.high %v281, %v281
    %v290 = vcombine.high %v288, %v288
    %v307 = vrot.slane %v230, 7
    %v308 = vrot.slane %v307, 2
    %v309 = vrot.slane %v238, 7
    %v310 = vrot.slane %v309, 2
    %v311 = vrot.slane %v237, 7
    %v312 = vrot.slane %v311, 2
    %v313 = vrot.slane %v239, 7
    %v314 = vrot.slane %v313, 2
    %v315 = vrot.slane %v247, 7
    %v316 = vrot.slane %v315, 2
    %v317 = vrot.slane %v255, 7
    %v318 = vrot.slane %v317, 2
    %v319 = vrot.slane %v254, 7
    %v320 = vrot.slane %v319, 2
    %v321 = vrot.slane %v256, 7
    %v322 = vrot.slane %v321, 2
    %v323 = vrot.slane %v264, 7
    %v324 = vrot.slane %v323, 2
    %v325 = vrot.slane %v272, 7
    %v326 = vrot.slane %v325, 2
    %v327 = vrot.slane %v271, 7
    %v328 = vrot.slane %v327, 2
    %v329 = vrot.slane %v273, 7
    %v330 = vrot.slane %v329, 2
    %v331 = vrot.slane %v281, 7
    %v332 = vrot.slane %v331, 2
    %v333 = vrot.slane %v289, 7
    %v334 = vrot.slane %v333, 2
    %v335 = vrot.slane %v288, 7
    %v336 = vrot.slane %v335, 2
    %v337 = vrot.slane %v290, 7
    %v338 = vrot.slane %v337, 2
    %v355 = vmax.f32 %v230, %v308
    %v356 = vmax.f32 %v238, %v310
    %v357 = vmax.f32 %v237, %v312
    %v358 = vmax.f32 %v239, %v314
    %v359 = vmax.f32 %v247, %v316
    %v360 = vmax.f32 %v255, %v318
    %v361 = vmax.f32 %v254, %v320
    %v362 = vmax.f32 %v256, %v322
    %v363 = vmax.f32 %v264, %v324
    %v364 = vmax.f32 %v272, %v326
    %v365 = vmax.f32 %v271, %v328
    %v366 = vmax.f32 %v273, %v330
    %v367 = vmax.f32 %v281, %v332
    %v368 = vmax.f32 %v289, %v334
    %v369 = vmax.f32 %v288, %v336
    %v370 = vmax.f32 %v290, %v338
    %v371 = vld [vmem:[%s2] sm:$0x1]
    %v373 = vlaneseq
    %v374 = vshrl.u32 %v373, 7
    %v375 = vsub.s32 0, %v374
    %v376 = vrot.slane %v371, %v375
    %v377 = vcombine.high %v376, %v376
    %v379 = vunpack.c.l.s4 1983009808
    %v380 = vunpack.c.0.s8 %v379
    %v381 = vlaneseq
    %v382 = vshrl.u32 %v381, 7
    %v383 = vsub.s32 %v380, %v382
    %v384 = vrot.slane %v376, %v383
    %v386 = vunpack.c.l.s4 1983009808
    %v387 = vunpack.c.0.s8 %v386
    %v388 = vlaneseq
    %v389 = vshrl.u32 %v388, 7
    %v390 = vsub.s32 %v387, %v389
    %v391 = vrot.slane %v377, %v390
    %v392 = vcombine.high %v384, %v384
    %v393 = vcombine.high %v391, %v391
    %v394 = vrot.slane %v384, 1
    %v395 = vrot.slane %v392, 1
    %v396 = vrot.slane %v391, 1
    %v397 = vrot.slane %v393, 1
    %v406 = vadd.f32 %v355, %v384
    %v407 = vadd.f32 %v356, %v394
    %v408 = vadd.f32 %v357, %v392
    %v409 = vadd.f32 %v358, %v395
    %v410 = vadd.f32 %v359, %v391
    %v411 = vadd.f32 %v360, %v396
    %v412 = vadd.f32 %v361, %v393
    %v413 = vadd.f32 %v362, %v397
    %v414 = vadd.f32 %v363, %v384
    %v415 = vadd.f32 %v364, %v394
    %v416 = vadd.f32 %v365, %v392
    %v417 = vadd.f32 %v366, %v395
    %v418 = vadd.f32 %v367, %v391
    %v419 = vadd.f32 %v368, %v396
    %v420 = vadd.f32 %v369, %v393
    %v421 = vadd.f32 %v370, %v397
    %v422 = vmax.f32 %v406, 0.0
    %v423 = vmax.f32 %v407, 0.0
    %v424 = vmax.f32 %v408, 0.0
    %v425 = vmax.f32 %v409, 0.0
    %v426 = vmax.f32 %v410, 0.0
    %v427 = vmax.f32 %v411, 0.0
    %v428 = vmax.f32 %v412, 0.0
    %v429 = vmax.f32 %v413, 0.0
    %v430 = vmax.f32 %v414, 0.0
    %v431 = vmax.f32 %v415, 0.0
    %v432 = vmax.f32 %v416, 0.0
    %v433 = vmax.f32 %v417, 0.0
    %v434 = vmax.f32 %v418, 0.0
    %v435 = vmax.f32 %v419, 0.0
    %v436 = vmax.f32 %v420, 0.0
    %v437 = vmax.f32 %v421, 0.0
    %v454 = vlaneseq
    %v455 = vshrl.u32 %v454, 7
    %v456 = vsub.s32 0, %v455
    %v457 = vrot.slane %v422, %v456
    %v458 = vlaneseq
    %v459 = vshrl.u32 %v458, 7
    %v460 = vsub.s32 0, %v459
    %v461 = vrot.slane %v423, %v460
    %v462 = vlaneseq
    %v463 = vshrl.u32 %v462, 7
    %v464 = vsub.s32 0, %v463
    %v465 = vrot.slane %v424, %v464
    %v466 = vlaneseq
    %v467 = vshrl.u32 %v466, 7
    %v468 = vsub.s32 0, %v467
    %v469 = vrot.slane %v425, %v468
    %v470 = vlaneseq
    %v471 = vshrl.u32 %v470, 7
    %v472 = vsub.s32 0, %v471
    %v473 = vrot.slane %v426, %v472
    %v474 = vlaneseq
    %v475 = vshrl.u32 %v474, 7
    %v476 = vsub.s32 0, %v475
    %v477 = vrot.slane %v427, %v476
    %v478 = vlaneseq
    %v479 = vshrl.u32 %v478, 7
    %v480 = vsub.s32 0, %v479
    %v481 = vrot.slane %v428, %v480
    %v482 = vlaneseq
    %v483 = vshrl.u32 %v482, 7
    %v484 = vsub.s32 0, %v483
    %v485 = vrot.slane %v429, %v484
    %v486 = vlaneseq
    %v487 = vshrl.u32 %v486, 7
    %v488 = vsub.s32 0, %v487
    %v489 = vrot.slane %v430, %v488
    %v490 = vlaneseq
    %v491 = vshrl.u32 %v490, 7
    %v492 = vsub.s32 0, %v491
    %v493 = vrot.slane %v431, %v492
    %v494 = vlaneseq
    %v495 = vshrl.u32 %v494, 7
    %v496 = vsub.s32 0, %v495
    %v497 = vrot.slane %v432, %v496
    %v498 = vlaneseq
    %v499 = vshrl.u32 %v498, 7
    %v500 = vsub.s32 0, %v499
    %v501 = vrot.slane %v433, %v500
    %v502 = vlaneseq
    %v503 = vshrl.u32 %v502, 7
    %v504 = vsub.s32 0, %v503
    %v505 = vrot.slane %v434, %v504
    %v506 = vlaneseq
    %v507 = vshrl.u32 %v506, 7
    %v508 = vsub.s32 0, %v507
    %v509 = vrot.slane %v435, %v508
    %v510 = vlaneseq
    %v511 = vshrl.u32 %v510, 7
    %v512 = vsub.s32 0, %v511
    %v513 = vrot.slane %v436, %v512
    %v514 = vlaneseq
    %v515 = vshrl.u32 %v514, 7
    %v516 = vsub.s32 0, %v515
    %v517 = vrot.slane %v437, %v516
    %vm518 = vcmask 1042434
    %v519 = vsel %vm518, %v461, %v457
    %vm520 = vcmask 1043459
    %v521 = vsel %vm520, %v465, %v519
    %vm522 = vcmask 1044484
    %v523 = vsel %vm522, %v469, %v521
    %vm524 = vcmask 1045509
    %v525 = vsel %vm524, %v473, %v523
    %vm526 = vcmask 1046534
    %v527 = vsel %vm526, %v477, %v525
    %vm528 = vcmask 1047559
    %v529 = vsel %vm528, %v481, %v527
    %v530 = vsel %vm518, %v493, %v489
    %v531 = vsel %vm520, %v497, %v530
    %v532 = vsel %vm522, %v501, %v531
    %v533 = vsel %vm524, %v505, %v532
    %v534 = vsel %vm526, %v509, %v533
    %v535 = vsel %vm528, %v513, %v534
    %v540 = vsel %vm41, 0.0, %v529
    %v541 = vsel %vm41, 0.0, %v535
    %v542 = vsel %vm41, %v485, 0.0
    %v543 = vsel %vm41, %v517, 0.0
    %v548 = vrot.slane %v540, 1
    %v549 = vrot.slane %v542, 1
    %v550 = vsel %vm62, %v548, %v549
    %v551 = vrot.slane %v541, 1
    %v552 = vrot.slane %v543, 1
    %v553 = vsel %vm62, %v551, %v552
    %554 = vrot.lane.b32.xlu0 %v550, 16
    %v555 = vpop.permute.xlu0 %554
    %556 = vrot.lane.b32.xlu0 %v553, 16
    %v557 = vpop.permute.xlu0 %556
    %v560 = vrot.slane %v540, 2
    %v561 = vrot.slane %v542, 2
    %v562 = vsel %vm85, %v560, %v561
    %v563 = vrot.slane %v541, 2
    %v564 = vrot.slane %v543, 2
    %v565 = vsel %vm85, %v563, %v564
    %566 = vrot.lane.b32.xlu0 %v562, 32
    %v567 = vpop.permute.xlu0 %566
    %568 = vrot.lane.b32.xlu0 %v565, 32
    %v569 = vpop.permute.xlu0 %568
    %v572 = vsel %vm113, %v540, %v555
    %v573 = vsel %vm113, %v541, %v557
    %vm574 = vcmask 261120
    %v575 = vsel %vm574, %v572, %v567
    %v576 = vsel %vm574, %v573, %v569
    %v577 = vld [vmem:[%s3] sm:$0xff]
    %v578 = vld [vmem:[%s3 + $0x8] sm:$0xff]
    %v579 = vld [vmem:[%s3 + $0x10] sm:$0xff]
    %v580 = vld [vmem:[%s3 + $0x18] sm:$0xff]
    %v581 = vld [vmem:[%s3 + $0x20] sm:$0xff]
    %v582 = vld [vmem:[%s3 + $0x28] sm:$0xff]
    %vm583 = vcmask 392192
    %v585 = vsel %vm583, %v575, 0
    %v588 = vsel %vm583, %v576, 0
    %590 = vmatprep.subr.mxu0 0.0
    %591 = vmatpush1.msra.mxu0 %v577
    %592 = vmatprep.subr.mxu0 0.0
    %593 = vmatpush1.msra.mxu0 %v578
    %594 = vmatprep.subr.mxu0 0.0
    %595 = vmatpush1.msra.mxu0 %v579
    %596 = vmatprep.subr.mxu0 0.0
    %597 = vmatpush1.msra.mxu0 %v580
    %598 = vmatprep.subr.mxu0 0.0
    %599 = vmatpush1.msra.mxu0 %v581
    %600 = vmatprep.subr.mxu0 0.0
    %601 = vmatpush1.msra.mxu0 %v582
    %602 = vmatprep.subr.mxu0 0.0
    %603 = vmatpush1.msra.mxu0 0.0
    %604 = vmatprep.subr.mxu0 0.0
    %605 = vmatpush1.msra.mxu0 0.0
    %606 = vmatprep.subr.mxu0 0.0
    %607 = vmatpush1.msra.mxu0 0.0
    %608 = vmatprep.subr.mxu0 0.0
    %609 = vmatpush1.msra.mxu0 0.0
    %610 = vmatprep.subr.mxu0 0.0
    %611 = vmatpush1.msra.mxu0 0.0
    %612 = vmatprep.subr.mxu0 0.0
    %613 = vmatpush1.msra.mxu0 0.0
    %614 = vmatprep.subr.mxu0 0.0
    %615 = vmatpush1.msra.mxu0 0.0
    %616 = vmatprep.subr.mxu0 0.0
    %617 = vmatpush1.msra.mxu0 0.0
    %618 = vmatprep.subr.mxu0 0.0
    %619 = vmatpush1.msra.mxu0 0.0
    %620 = vmatprep.subr.mxu0 0.0
    %621 = vmatpush1.msra.mxu0 0.0
    %622 = vmatprep.subr.mxu0 0.0
    %623 = vmatpush1.msra.mxu0 0.0
    %624 = vmatprep.subr.mxu0 0.0
    %625 = vmatpush1.msra.mxu0 0.0
    %626 = vmatprep.subr.mxu0 0.0
    %627 = vmatpush1.msra.mxu0 0.0
    %628 = vmatprep.subr.mxu0 0.0
    %629 = vmatpush1.msra.mxu0 0.0
    %630 = vmatprep.subr.mxu0 0.0
    %631 = vmatpush1.msra.mxu0 0.0
    %632 = vmatprep.subr.mxu0 0.0
    %633 = vmatpush1.msra.mxu0 0.0
    %634 = vmatprep.subr.mxu0 0.0
    %635 = vmatpush1.msra.mxu0 0.0
    %636 = vmatprep.subr.mxu0 0.0
    %637 = vmatpush1.msra.mxu0 0.0
    %638 = vmatprep.subr.mxu0 0.0
    %639 = vmatpush1.msra.mxu0 0.0
    %640 = vmatprep.subr.mxu0 0.0
    %641 = vmatpush1.msra.mxu0 0.0
    %642 = vmatprep.subr.mxu0 0.0
    %643 = vmatpush1.msra.mxu0 0.0
    %644 = vmatprep.subr.mxu0 0.0
    %645 = vmatpush1.msra.mxu0 0.0
    %646 = vmatprep.subr.mxu0 0.0
    %647 = vmatpush1.msra.mxu0 0.0
    %648 = vmatprep.subr.mxu0 0.0
    %649 = vmatpush1.msra.mxu0 0.0
    %650 = vmatprep.subr.mxu0 0.0
    %651 = vmatpush1.msra.mxu0 0.0
    %652 = vmatprep.subr.mxu0 0.0
    %653 = vmatpush1.msra.mxu0 0.0
    %654 = vmatprep.mubr.f32.mxu0 0.0
    %655 = vmatmul.mubr.f32.gmra.mrb[0].mxu0 %v585
    %v656 = vpop.f32.mrb[0].mxu0
    %v657 = vadd.f32 0.0, %v656
    %v658 = vpop.f32.mrb[0].mxu0
    %659 = vmatprep.mubr.f32.mxu0 0.0
    %660 = vmatmul.mubr.f32.gmra.mrb[0].mxu0 %v588
    %v661 = vpop.f32.mrb[0].mxu0
    %v662 = vadd.f32 0.0, %v661
    %v663 = vpop.f32.mrb[0].mxu0
    %664 = vdwg.mxu0
    %v667 = vcombine.high %v657, %v657
    %v669 = vunpack.c.l.s4 1983009808
    %v670 = vunpack.c.0.s8 %v669
    %v671 = vlaneseq
    %v672 = vshrl.u32 %v671, 7
    %v673 = vsub.s32 %v670, %v672
    %v674 = vrot.slane %v657, %v673
    %v676 = vunpack.c.l.s4 1983009808
    %v677 = vunpack.c.0.s8 %v676
    %v678 = vlaneseq
    %v679 = vshrl.u32 %v678, 7
    %v680 = vsub.s32 %v677, %v679
    %v681 = vrot.slane %v667, %v680
    %v682 = vcombine.high %v674, %v674
    %v683 = vcombine.high %v681, %v681
    %v684 = vcombine.high %v662, %v662
    %v686 = vunpack.c.l.s4 1983009808
    %v687 = vunpack.c.0.s8 %v686
    %v688 = vlaneseq
    %v689 = vshrl.u32 %v688, 7
    %v690 = vsub.s32 %v687, %v689
    %v691 = vrot.slane %v662, %v690
    %v693 = vunpack.c.l.s4 1983009808
    %v694 = vunpack.c.0.s8 %v693
    %v695 = vlaneseq
    %v696 = vshrl.u32 %v695, 7
    %v697 = vsub.s32 %v694, %v696
    %v698 = vrot.slane %v684, %v697
    %v699 = vcombine.high %v691, %v691
    %v700 = vcombine.high %v698, %v698
    %v709 = vrot.slane %v674, 7
    %v710 = vrot.slane %v709, 2
    %v711 = vrot.slane %v682, 7
    %v712 = vrot.slane %v711, 2
    %v713 = vrot.slane %v681, 7
    %v714 = vrot.slane %v713, 2
    %v715 = vrot.slane %v683, 7
    %v716 = vrot.slane %v715, 2
    %v717 = vrot.slane %v691, 7
    %v718 = vrot.slane %v717, 2
    %v719 = vrot.slane %v699, 7
    %v720 = vrot.slane %v719, 2
    %v721 = vrot.slane %v698, 7
    %v722 = vrot.slane %v721, 2
    %v723 = vrot.slane %v700, 7
    %v724 = vrot.slane %v723, 2
    %v733 = vmax.f32 %v674, %v710
    %v734 = vmax.f32 %v682, %v712
    %v735 = vmax.f32 %v681, %v714
    %v736 = vmax.f32 %v683, %v716
    %v737 = vmax.f32 %v691, %v718
    %v738 = vmax.f32 %v699, %v720
    %v739 = vmax.f32 %v698, %v722
    %v740 = vmax.f32 %v700, %v724
    %v741 = vld [vmem:[%s4] sm:$0x1]
    %v743 = vlaneseq
    %v744 = vshrl.u32 %v743, 7
    %v745 = vsub.s32 0, %v744
    %v746 = vrot.slane %v741, %v745
    %v748 = vunpack.c.l.s4 1983009808
    %v749 = vunpack.c.0.s8 %v748
    %v750 = vlaneseq
    %v751 = vshrl.u32 %v750, 7
    %v752 = vsub.s32 %v749, %v751
    %v753 = vrot.slane %v746, %v752
    %v754 = vcombine.high %v753, %v753
    %v755 = vrot.slane %v753, 1
    %v756 = vrot.slane %v754, 1
    %v761 = vadd.f32 %v733, %v753
    %v762 = vadd.f32 %v734, %v755
    %v763 = vadd.f32 %v735, %v754
    %v764 = vadd.f32 %v736, %v756
    %v765 = vadd.f32 %v737, %v753
    %v766 = vadd.f32 %v738, %v755
    %v767 = vadd.f32 %v739, %v754
    %v768 = vadd.f32 %v740, %v756
    %v769 = vmax.f32 %v761, 0.0
    %v770 = vmax.f32 %v762, 0.0
    %v771 = vmax.f32 %v763, 0.0
    %v772 = vmax.f32 %v764, 0.0
    %v773 = vmax.f32 %v765, 0.0
    %v774 = vmax.f32 %v766, 0.0
    %v775 = vmax.f32 %v767, 0.0
    %v776 = vmax.f32 %v768, 0.0
    %v785 = vsel %vm522, %v769, %v769
    %v786 = vsel %vm526, %v769, %v785
    %v787 = vrot.slane %v770, 7
    %vm788 = vcmask 1041409
    %v789 = vsel %vm788, %v787, %v786
    %v790 = vsel %vm520, %v787, %v789
    %v791 = vsel %vm524, %v787, %v790
    %v792 = vsel %vm528, %v787, %v791
    %v793 = vsel %vm522, %v771, %v771
    %v794 = vsel %vm526, %v771, %v793
    %v795 = vrot.slane %v772, 7
    %v796 = vsel %vm788, %v795, %v794
    %v797 = vsel %vm520, %v795, %v796
    %v798 = vsel %vm524, %v795, %v797
    %v799 = vsel %vm528, %v795, %v798
    %v800 = vsel %vm522, %v773, %v773
    %v801 = vsel %vm526, %v773, %v800
    %v802 = vrot.slane %v774, 7
    %v803 = vsel %vm788, %v802, %v801
    %v804 = vsel %vm520, %v802, %v803
    %v805 = vsel %vm524, %v802, %v804
    %v806 = vsel %vm528, %v802, %v805
    %v807 = vsel %vm522, %v775, %v775
    %v808 = vsel %vm526, %v775, %v807
    %v809 = vrot.slane %v776, 7
    %v810 = vsel %vm788, %v809, %v808
    %v811 = vsel %vm520, %v809, %v810
    %v812 = vsel %vm524, %v809, %v811
    %v813 = vsel %vm528, %v809, %v812
    %v818 = vcombine.low %v792, %v806
    %v820 = vunpack.c.l.s4 1934713408
    %v821 = vunpack.c.0.s8 %v820
    %v822 = vlaneseq
    %v823 = vshrl.u32 %v822, 7
    %v824 = vsub.s32 %v821, %v823
    %v825 = vrot.slane %v818, %v824
    %v826 = vcombine.high %v825, 0.0
    %v827 = vcombine.low %v799, %v813
    %v829 = vunpack.c.l.s4 1934713408
    %v830 = vunpack.c.0.s8 %v829
    %v831 = vlaneseq
    %v832 = vshrl.u32 %v831, 7
    %v833 = vsub.s32 %v830, %v832
    %v834 = vrot.slane %v827, %v833
    %v835 = vcombine.high %v834, 0.0
    %v838 = vunpack.c.l.s4 1983009808
    %v839 = vunpack.c.0.s8 %v838
    %v840 = vlaneseq
    %v841 = vshrl.u32 %v840, 7
    %v842 = vsub.s32 %v839, %v841
    %v843 = vrot.slane %v826, %v842
    %844 = vrot.lane.b32.xlu0 %v843, 32
    %v845 = vpop.permute.xlu0 %844
    %v849 = vunpack.c.l.s4 1983009808
    %v850 = vunpack.c.0.s8 %v849
    %v851 = vlaneseq
    %v852 = vshrl.u32 %v851, 7
    %v853 = vsub.s32 %v850, %v852
    %v854 = vrot.slane %v834, %v853
    %855 = vrot.lane.b32.xlu0 %v854, 64
    %v856 = vpop.permute.xlu0 %855
    %v860 = vunpack.c.l.s4 1983009808
    %v861 = vunpack.c.0.s8 %v860
    %v862 = vlaneseq
    %v863 = vshrl.u32 %v862, 7
    %v864 = vsub.s32 %v861, %v863
    %v865 = vrot.slane %v835, %v864
    %866 = vrot.lane.b32.xlu0 %v865, 96
    %v867 = vpop.permute.xlu0 %866
    %v869 = vsel %vm574, %v825, %v845
    %vm870 = vcmask 523264
    %v871 = vsel %vm870, %v869, %v856
    %vm872 = vcmask 785408
    %v873 = vsel %vm872, %v871, %v867
    %v874 = vld [vmem:[%s5] sm:$0xff]
    %v875 = vld [vmem:[%s5 + $0x8] sm:$0xff]
    %v876 = vld [vmem:[%s5 + $0x10] sm:$0xff]
    %v877 = vld [vmem:[%s5 + $0x18] sm:$0xff]
    %v878 = vld [vmem:[%s5 + $0x20] sm:$0xff]
    %v879 = vld [vmem:[%s5 + $0x28] sm:$0xff]
    %v880 = vld [vmem:[%s5 + $0x30] sm:$0xff]
    %v881 = vld [vmem:[%s5 + $0x38] sm:$0xff]
    %v882 = vld [vmem:[%s5 + $0x40] sm:$0xff]
    %v883 = vld [vmem:[%s5 + $0x48] sm:$0xff]
    %v884 = vld [vmem:[%s5 + $0x50] sm:$0xff]
    %v885 = vld [vmem:[%s5 + $0x58] sm:$0xff]
    %v886 = vld [vmem:[%s5 + $0x60] sm:$0xff]
    %v887 = vld [vmem:[%s5 + $0x68] sm:$0xff]
    %v888 = vld [vmem:[%s5 + $0x70] sm:$0xff]
    %v889 = vld [vmem:[%s5 + $0x78] sm:$0xff]
    %v890 = vld [vmem:[%s6] sm:$0x1]
    %v892 = vlaneseq
    %v893 = vshrl.u32 %v892, 7
    %v894 = vsub.s32 0, %v893
    %v895 = vrot.slane %v890, %v894
    %897 = vmatprep.subr.mxu0 0.0
    %898 = vmatpush1.msra.mxu0 %v874
    %899 = vmatprep.subr.mxu0 0.0
    %900 = vmatpush1.msra.mxu0 %v875
    %901 = vmatprep.subr.mxu0 0.0
    %902 = vmatpush1.msra.mxu0 %v876
    %903 = vmatprep.subr.mxu0 0.0
    %904 = vmatpush1.msra.mxu0 %v877
    %905 = vmatprep.subr.mxu0 0.0
    %906 = vmatpush1.msra.mxu0 %v878
    %907 = vmatprep.subr.mxu0 0.0
    %908 = vmatpush1.msra.mxu0 %v879
    %909 = vmatprep.subr.mxu0 0.0
    %910 = vmatpush1.msra.mxu0 %v880
    %911 = vmatprep.subr.mxu0 0.0
    %912 = vmatpush1.msra.mxu0 %v881
    %913 = vmatprep.subr.mxu0 0.0
    %914 = vmatpush1.msra.mxu0 %v882
    %915 = vmatprep.subr.mxu0 0.0
    %916 = vmatpush1.msra.mxu0 %v883
    %917 = vmatprep.subr.mxu0 0.0
    %918 = vmatpush1.msra.mxu0 %v884
    %919 = vmatprep.subr.mxu0 0.0
    %920 = vmatpush1.msra.mxu0 %v885
    %921 = vmatprep.subr.mxu0 0.0
    %922 = vmatpush1.msra.mxu0 %v886
    %923 = vmatprep.subr.mxu0 0.0
    %924 = vmatpush1.msra.mxu0 %v887
    %925 = vmatprep.subr.mxu0 0.0
    %926 = vmatpush1.msra.mxu0 %v888
    %927 = vmatprep.subr.mxu0 0.0
    %928 = vmatpush1.msra.mxu0 %v889
    %929 = vmatprep.subr.mxu0 0.0
    %930 = vmatpush1.msra.mxu0 0.0
    %931 = vmatprep.subr.mxu0 0.0
    %932 = vmatpush1.msra.mxu0 0.0
    %933 = vmatprep.subr.mxu0 0.0
    %934 = vmatpush1.msra.mxu0 0.0
    %935 = vmatprep.subr.mxu0 0.0
    %936 = vmatpush1.msra.mxu0 0.0
    %937 = vmatprep.subr.mxu0 0.0
    %938 = vmatpush1.msra.mxu0 0.0
    %939 = vmatprep.subr.mxu0 0.0
    %940 = vmatpush1.msra.mxu0 0.0
    %941 = vmatprep.subr.mxu0 0.0
    %942 = vmatpush1.msra.mxu0 0.0
    %943 = vmatprep.subr.mxu0 0.0
    %944 = vmatpush1.msra.mxu0 0.0
    %945 = vmatprep.subr.mxu0 0.0
    %946 = vmatpush1.msra.mxu0 0.0
    %947 = vmatprep.subr.mxu0 0.0
    %948 = vmatpush1.msra.mxu0 0.0
    %949 = vmatprep.subr.mxu0 0.0
    %950 = vmatpush1.msra.mxu0 0.0
    %951 = vmatprep.subr.mxu0 0.0
    %952 = vmatpush1.msra.mxu0 0.0
    %953 = vmatprep.subr.mxu0 0.0
    %954 = vmatpush1.msra.mxu0 0.0
    %955 = vmatprep.subr.mxu0 0.0
    %956 = vmatpush1.msra.mxu0 0.0
    %957 = vmatprep.subr.mxu0 0.0
    %958 = vmatpush1.msra.mxu0 0.0
    %959 = vmatprep.subr.mxu0 0.0
    %960 = vmatpush1.msra.mxu0 0.0
    %961 = vmatprep.mubr.f32.mxu0 0.0
    %962 = vmatmul.mubr.f32.gmra.mrb[0].mxu0 %v873
    %v963 = vpop.f32.mrb[0].mxu0
    %v964 = vadd.f32 %v895, %v963
    %v965 = vpop.f32.mrb[0].mxu0
    %966 = vdwg.mxu0
    %v967 = vmax.f32 %v964, 0.0
    %v968 = vld [vmem:[%s7] sm:$0xff]
    %v969 = vld [vmem:[%s7 + $0x8] sm:$0xff]
    %v970 = vld [vmem:[%s7 + $0x10] sm:$0xff]
    %v971 = vld [vmem:[%s7 + $0x18] sm:$0xff]
    %v972 = vld [vmem:[%s7 + $0x20] sm:$0xff]
    %v973 = vld [vmem:[%s7 + $0x28] sm:$0xff]
    %v974 = vld [vmem:[%s7 + $0x30] sm:$0xff]
    %v975 = vld [vmem:[%s7 + $0x38] sm:$0xff]
    %v976 = vld [vmem:[%s8] sm:$0x1]
    %v978 = vlaneseq
    %v979 = vshrl.u32 %v978, 7
    %v980 = vsub.s32 0, %v979
    %v981 = vrot.slane %v976, %v980
    %v984 = vsel %vm870, %v967, 0
    %986 = vmatprep.subr.mxu0 0.0
    %987 = vmatpush1.msra.mxu0 %v968
    %988 = vmatprep.subr.mxu0 0.0
    %989 = vmatpush1.msra.mxu0 %v969
    %990 = vmatprep.subr.mxu0 0.0
    %991 = vmatpush1.msra.mxu0 %v970
    %992 = vmatprep.subr.mxu0 0.0
    %993 = vmatpush1.msra.mxu0 %v971
    %994 = vmatprep.subr.mxu0 0.0
    %995 = vmatpush1.msra.mxu0 %v972
    %996 = vmatprep.subr.mxu0 0.0
    %997 = vmatpush1.msra.mxu0 %v973
    %998 = vmatprep.subr.mxu0 0.0
    %999 = vmatpush1.msra.mxu0 %v974
    %1000 = vmatprep.subr.mxu0 0.0
    %1001 = vmatpush1.msra.mxu0 %v975
    %1002 = vmatprep.subr.mxu0 0.0
    %1003 = vmatpush1.msra.mxu0 0.0
    %1004 = vmatprep.subr.mxu0 0.0
    %1005 = vmatpush1.msra.mxu0 0.0
    %1006 = vmatprep.subr.mxu0 0.0
    %1007 = vmatpush1.msra.mxu0 0.0
    %1008 = vmatprep.subr.mxu0 0.0
    %1009 = vmatpush1.msra.mxu0 0.0
    %1010 = vmatprep.subr.mxu0 0.0
    %1011 = vmatpush1.msra.mxu0 0.0
    %1012 = vmatprep.subr.mxu0 0.0
    %1013 = vmatpush1.msra.mxu0 0.0
    %1014 = vmatprep.subr.mxu0 0.0
    %1015 = vmatpush1.msra.mxu0 0.0
    %1016 = vmatprep.subr.mxu0 0.0
    %1017 = vmatpush1.msra.mxu0 0.0
    %1018 = vmatprep.subr.mxu0 0.0
    %1019 = vmatpush1.msra.mxu0 0.0
    %1020 = vmatprep.subr.mxu0 0.0
    %1021 = vmatpush1.msra.mxu0 0.0
    %1022 = vmatprep.subr.mxu0 0.0
    %1023 = vmatpush1.msra.mxu0 0.0
    %1024 = vmatprep.subr.mxu0 0.0
    %1025 = vmatpush1.msra.mxu0 0.0
    %1026 = vmatprep.subr.mxu0 0.0
    %1027 = vmatpush1.msra.mxu0 0.0
    %1028 = vmatprep.subr.mxu0 0.0
    %1029 = vmatpush1.msra.mxu0 0.0
    %1030 = vmatprep.subr.mxu0 0.0
    %1031 = vmatpush1.msra.mxu0 0.0
    %1032 = vmatprep.subr.mxu0 0.0
    %1033 = vmatpush1.msra.mxu0 0.0
    %1034 = vmatprep.subr.mxu0 0.0
    %1035 = vmatpush1.msra.mxu0 0.0
    %1036 = vmatprep.subr.mxu0 0.0
    %1037 = vmatpush1.msra.mxu0 0.0
    %1038 = vmatprep.subr.mxu0 0.0
    %1039 = vmatpush1.msra.mxu0 0.0
    %1040 = vmatprep.subr.mxu0 0.0
    %1041 = vmatpush1.msra.mxu0 0.0
    %1042 = vmatprep.subr.mxu0 0.0
    %1043 = vmatpush1.msra.mxu0 0.0
    %1044 = vmatprep.subr.mxu0 0.0
    %1045 = vmatpush1.msra.mxu0 0.0
    %1046 = vmatprep.subr.mxu0 0.0
    %1047 = vmatpush1.msra.mxu0 0.0
    %1048 = vmatprep.subr.mxu0 0.0
    %1049 = vmatpush1.msra.mxu0 0.0
    %1050 = vmatprep.mubr.f32.mxu0 0.0
    %1051 = vmatmul.mubr.f32.gmra.mrb[0].mxu0 %v984
    %v1052 = vpop.f32.mrb[0].mxu0
    %v1053 = vadd.f32 %v981, %v1052
    %v1054 = vpop.f32.mrb[0].mxu0
    %1055 = vdwg.mxu0
    %v1056 = vmax.f32 %v1053, 0.0
    %vm1057 = vcmask 254976
    %1058 = vst.msk [vmem:[#allocation2] sm:$0x3] %vm1057, %v1056
    // Predicated region
    $region38: #{cnn1d_forward.1} parent=1 // pred_check
      _
    $region39: #{cnn1d_forward.1} parent=1 // pred_check_branch
      %1060 = sbr.rel (0) target = $region41
    $region40: #{cnn1d_forward.1} parent=1 // pred_region
      %s1062 = ssub.s32 32, 32
      %1063 = vsyncadd [#allocation3], %s1062
      %s1065 = sshll.u32 [#allocation2], 4
      %s1066 = int_to_ptr.vmem [resolvable:$true] %s1065
      %1068 = dma.vmem_to_hbm [thread:$0]  %s1066, 32, %s9, [#allocation3]
    $region41: #{cnn1d_forward.1} parent=1 // pred_fallthru
      _
    // Predicated region
    $region42: #{cnn1d_forward.1} parent=1 // pred_check
      _
    $region43: #{cnn1d_forward.1} parent=1 // pred_check_branch
      %1070 = sbr.rel (0) target = $region45
    $region44: #{cnn1d_forward.1} parent=1 // pred_region
      %1071 = dma.done [#allocation3], 32
    $region45: #{cnn1d_forward.1} parent=1 // pred_fallthru
      _
    %1072 = vsyncpa [#allocation3], 1

</llo_original>
